<compile_context>
chip_gen: v5e
topology: v5e:2x2
jax: 0.10.0
libtpu: 0.0.40
codegen_flags: <defaults>
</compile_context>

<pallas_src>
import functools

import jax
import jax.numpy as jnp
import numpy as np
from jax.experimental import pallas as pl
from jax.experimental.pallas import tpu as pltpu


def _round_up(x, m):
    return ((x + m - 1) // m) * m


def bow_kernel(idx_ref, w_eff_ref, b_ref, out_ref, acc_ref):
    """Grid = (batch tiles [parallel], W_eff row tiles [arbitrary])."""
    k = pl.program_id(1)

    idx = idx_ref[...]                                   # [Bt, L] int32
    Bt, L = idx.shape
    TV = w_eff_ref.shape[0]

    # Vocab ids covered by this W_eff row tile: [k*TV, (k+1)*TV).
    # Built once per grid step (hoisted out of the L loop).
    vocab = k * TV + jax.lax.broadcasted_iota(jnp.int32, (Bt, TV), 1)

    # counts[b, v] = #occurrences of token v in example b, restricted to this
    # V tile.  Static Python loop over the small sequence axis => fully
    # unrolled; int32 accumulation (cmp + iadd), single convert after the loop.
    counts = jnp.zeros((Bt, TV), jnp.int32)
    for l in range(L):
        tok = idx[:, l:l + 1]                            # [Bt, 1], static slice
        counts = counts + (tok == vocab).astype(jnp.int32)

    # One lane-dense MXU matmul per tile (contraction dim TV % 128 == 0).
    # Counts cast once to the weight dtype (bf16: exact for counts < 256).
    partial = jnp.dot(counts.astype(w_eff_ref.dtype), w_eff_ref[...],
                      preferred_element_type=jnp.float32)

    @pl.when(k == 0)
    def _():
        acc_ref[...] = jnp.zeros_like(acc_ref)

    acc_ref[...] += partial

    @pl.when(k == pl.num_programs(1) - 1)
    def _():
        out_ref[...] = acc_ref[...] + b_ref[...]


def make_bow_forward(embed_table, w, b, *, weights_dtype=jnp.bfloat16,
                     b_tile_max=256, v_tile_max=8192):
    """Precompute the fused, padded classifier table once (model constants)
    and return a jitted forward(x).

    embed_table: [V, D] f32;  w: [2, D] (nn.Linear weight);  b: [2].
    weights_dtype: jnp.bfloat16 (recommended on v6e/v7x/v5e MXU) or jnp.float32
                   for bit-tight agreement with the f32 reference.
    """
    V, D = embed_table.shape
    n_cls = w.shape[0]
    LANE = 128

    # Fold the classifier into the table once: W_eff = embed @ W^T  -> [V, 2].
    w_eff = jnp.dot(embed_table.astype(jnp.float32), w.astype(jnp.float32).T)

    # Pad V to a multiple of the V tile (zero rows contribute nothing) and
    # pad the class axis to a lane-dense 128-wide slab.
    V_pad = _round_up(V, LANE)
    TV = min(v_tile_max, V_pad)
    V_pad = _round_up(V_pad, TV)
    N_pad = LANE

    w_eff_pad = jnp.zeros((V_pad, N_pad), jnp.float32).at[:V, :n_cls].set(w_eff)
    w_eff_pad = w_eff_pad.astype(weights_dtype)
    bias_pad = jnp.zeros((1, N_pad), jnp.float32).at[0, :n_cls].set(
        b.astype(jnp.float32))

    w_bytes = jnp.dtype(weights_dtype).itemsize

    @jax.jit
    def forward(x):
        B, L = x.shape
        # Batch tile: up to 256 rows (MXU M-dim / megacore split), adapted
        # down to the (8-padded) batch at toy sizes so no padded work is done.
        B_pad = _round_up(max(B, 8), 8)
        B_TILE = min(b_tile_max, B_pad)
        B_pad = _round_up(B_pad, B_TILE)
        nb = B_pad // B_TILE
        nk = V_pad // TV

        # Padded batch rows carry token id 0; their rows are sliced away below.
        x_pad = jnp.zeros((B_pad, L), jnp.int32).at[:B].set(x.astype(jnp.int32))

        grid_spec = pltpu.PrefetchScalarGridSpec(
            num_scalar_prefetch=0,
            grid=(nb, nk),
            in_specs=[
                pl.BlockSpec((B_TILE, L), lambda i, k: (i, 0)),     # token ids
                pl.BlockSpec((TV, N_pad), lambda i, k: (k, 0)),     # W_eff rows
                pl.BlockSpec((1, N_pad), lambda i, k: (0, 0)),      # bias
            ],
            out_specs=pl.BlockSpec((B_TILE, N_pad), lambda i, k: (i, 0)),
            scratch_shapes=[pltpu.VMEM((B_TILE, N_pad), jnp.float32)],
        )

        # Explicit VMEM budget: W_eff double-buffer + ids + output + acc +
        # the [B_TILE, TV] counts intermediate, with headroom; capped at
        # v7x's 64 MiB physical VMEM so the same kernel is portable.
        vmem_need = (2 * TV * N_pad * w_bytes
                     + 2 * B_TILE * L * 4
                     + 2 * B_TILE * N_pad * 4
                     + B_TILE * N_pad * 4
                     + B_TILE * TV * 4)
        vmem_limit = int(min(64 << 20, max(32 << 20, 2 * vmem_need)))

        out_pad = pl.pallas_call(
            bow_kernel,
            out_shape=jax.ShapeDtypeStruct((B_pad, N_pad), jnp.float32),
            grid_spec=grid_spec,
            compiler_params=pltpu.CompilerParams(
                dimension_semantics=("parallel", "arbitrary"),
                vmem_limit_bytes=vmem_limit),
        )(x_pad, w_eff_pad, bias_pad)

        return out_pad[:B, :n_cls]

    return forward


if __name__ == "__main__":
    key = jax.random.PRNGKey(0)
    k_emb, k_idx, k_w, k_b = jax.random.split(key, 4)

    # Small, deterministic shapes consistent with the module.
    V, D = 64, 32        # vocab size, embedding dim
    B, L = 8, 16         # batch, sequence length

    embed_table = jax.random.normal(k_emb, (V, D), dtype=jnp.float32)
    x = jax.random.randint(k_idx, (B, L), 0, V, dtype=jnp.int32)
    w = jax.random.normal(k_w, (2, D), dtype=jnp.float32) * 0.1   # nn.Linear weight [2, D]
    b = jax.random.normal(k_b, (2,), dtype=jnp.float32) * 0.1     # nn.Linear bias [2]

    # Pure-JAX reference (unfused order, f32): classify(embed(x).sum(1)).
    ref = jnp.take(embed_table, x, axis=0).sum(axis=1) @ w.T + b

    # 1) Exact-semantics check: f32 weights, tight tolerance.
    fwd_f32 = make_bow_forward(embed_table, w, b, weights_dtype=jnp.float32)
    out_f32 = jax.block_until_ready(fwd_f32(x))
    np.testing.assert_allclose(np.asarray(out_f32), np.asarray(ref),
                               rtol=1e-5, atol=1e-4)

    # 2) Perf-recommended path: bf16 W_eff + bf16 counts at the MXU
    #    (counts stay int32 in the VPU loop; exact for counts < 256).
    fwd_bf16 = make_bow_forward(embed_table, w, b, weights_dtype=jnp.bfloat16)
    out_bf16 = jax.block_until_ready(fwd_bf16(x))
    np.testing.assert_allclose(np.asarray(out_bf16), np.asarray(ref),
                               rtol=2e-2, atol=1e-1)

    print("KERNEL_OK")
</pallas_src>

<mosaic_0001>
module attributes {stable_mosaic.version = 11 : i64} {
  func.func @bow_kernel(%arg0: i32, %arg1: i32, %arg2: memref<8x16xi32, #tpu.memory_space<vmem>>, %arg3: memref<128x128xf32, #tpu.memory_space<vmem>>, %arg4: memref<1x128xf32, #tpu.memory_space<vmem>>, %arg5: memref<8x128xf32, #tpu.memory_space<vmem>>, %arg6: memref<8x128xf32, #tpu.memory_space<vmem>>) attributes {dimension_semantics = [#tpu.dimension_semantics<parallel>, #tpu.dimension_semantics<arbitrary>], iteration_bounds = array<i64: 1, 1>, scalar_prefetch = 0 : i64, scratch_operands = 1 : i64, tpu.core_type = #tpu.core_type<tc>, window_params = [{transform_indices = @transform_0, window_bounds = array<i64: 8, 16>}, {transform_indices = @transform_1, window_bounds = array<i64: 128, 128>}, {pipeline_mode = #tpu.pipeline_mode<synchronous>, transform_indices = @transform_2, window_bounds = array<i64: 1, 128>}, {transform_indices = @transform_3, window_bounds = array<i64: 8, 128>}]} {
    %c0 = arith.constant 0 : index
    %c0_0 = arith.constant 0 : index
    %0 = vector.load %arg2[%c0, %c0_0] : memref<8x16xi32, #tpu.memory_space<vmem>>, vector<8x16xi32>
    %c128_i32 = arith.constant 128 : i32
    %1 = arith.muli %arg1, %c128_i32 : i32
    %2 = tpu.iota {dimensions = array<i32: 1>} : vector<8x128xi32>
    %3 = vector.broadcast %1 : i32 to vector<8x128xi32>
    %4 = arith.addi %3, %2 : vector<8x128xi32>
    %c0_i32 = arith.constant 0 : i32
    %5 = vector.broadcast %c0_i32 : i32 to vector<8x128xi32>
    %6 = vector.extract_strided_slice %0 {offsets = [0, 0], sizes = [8, 1], strides = [1, 1]} : vector<8x16xi32> to vector<8x1xi32>
    %7 = vector.broadcast %6 : vector<8x1xi32> to vector<8x128xi32>
    %8 = arith.cmpi eq, %7, %4 : vector<8x128xi32>
    %9 = arith.extui %8 : vector<8x128xi1> to vector<8x128xi32>
    %10 = arith.addi %5, %9 : vector<8x128xi32>
    %11 = vector.extract_strided_slice %0 {offsets = [0, 1], sizes = [8, 1], strides = [1, 1]} : vector<8x16xi32> to vector<8x1xi32>
    %12 = vector.broadcast %11 : vector<8x1xi32> to vector<8x128xi32>
    %13 = arith.cmpi eq, %12, %4 : vector<8x128xi32>
    %14 = arith.extui %13 : vector<8x128xi1> to vector<8x128xi32>
    %15 = arith.addi %10, %14 : vector<8x128xi32>
    %16 = vector.extract_strided_slice %0 {offsets = [0, 2], sizes = [8, 1], strides = [1, 1]} : vector<8x16xi32> to vector<8x1xi32>
    %17 = vector.broadcast %16 : vector<8x1xi32> to vector<8x128xi32>
    %18 = arith.cmpi eq, %17, %4 : vector<8x128xi32>
    %19 = arith.extui %18 : vector<8x128xi1> to vector<8x128xi32>
    %20 = arith.addi %15, %19 : vector<8x128xi32>
    %21 = vector.extract_strided_slice %0 {offsets = [0, 3], sizes = [8, 1], strides = [1, 1]} : vector<8x16xi32> to vector<8x1xi32>
    %22 = vector.broadcast %21 : vector<8x1xi32> to vector<8x128xi32>
    %23 = arith.cmpi eq, %22, %4 : vector<8x128xi32>
    %24 = arith.extui %23 : vector<8x128xi1> to vector<8x128xi32>
    %25 = arith.addi %20, %24 : vector<8x128xi32>
    %26 = vector.extract_strided_slice %0 {offsets = [0, 4], sizes = [8, 1], strides = [1, 1]} : vector<8x16xi32> to vector<8x1xi32>
    %27 = vector.broadcast %26 : vector<8x1xi32> to vector<8x128xi32>
    %28 = arith.cmpi eq, %27, %4 : vector<8x128xi32>
    %29 = arith.extui %28 : vector<8x128xi1> to vector<8x128xi32>
    %30 = arith.addi %25, %29 : vector<8x128xi32>
    %31 = vector.extract_strided_slice %0 {offsets = [0, 5], sizes = [8, 1], strides = [1, 1]} : vector<8x16xi32> to vector<8x1xi32>
    %32 = vector.broadcast %31 : vector<8x1xi32> to vector<8x128xi32>
    %33 = arith.cmpi eq, %32, %4 : vector<8x128xi32>
    %34 = arith.extui %33 : vector<8x128xi1> to vector<8x128xi32>
    %35 = arith.addi %30, %34 : vector<8x128xi32>
    %36 = vector.extract_strided_slice %0 {offsets = [0, 6], sizes = [8, 1], strides = [1, 1]} : vector<8x16xi32> to vector<8x1xi32>
    %37 = vector.broadcast %36 : vector<8x1xi32> to vector<8x128xi32>
    %38 = arith.cmpi eq, %37, %4 : vector<8x128xi32>
    %39 = arith.extui %38 : vector<8x128xi1> to vector<8x128xi32>
    %40 = arith.addi %35, %39 : vector<8x128xi32>
    %41 = vector.extract_strided_slice %0 {offsets = [0, 7], sizes = [8, 1], strides = [1, 1]} : vector<8x16xi32> to vector<8x1xi32>
    %42 = vector.broadcast %41 : vector<8x1xi32> to vector<8x128xi32>
    %43 = arith.cmpi eq, %42, %4 : vector<8x128xi32>
    %44 = arith.extui %43 : vector<8x128xi1> to vector<8x128xi32>
    %45 = arith.addi %40, %44 : vector<8x128xi32>
    %46 = vector.extract_strided_slice %0 {offsets = [0, 8], sizes = [8, 1], strides = [1, 1]} : vector<8x16xi32> to vector<8x1xi32>
    %47 = vector.broadcast %46 : vector<8x1xi32> to vector<8x128xi32>
    %48 = arith.cmpi eq, %47, %4 : vector<8x128xi32>
    %49 = arith.extui %48 : vector<8x128xi1> to vector<8x128xi32>
    %50 = arith.addi %45, %49 : vector<8x128xi32>
    %51 = vector.extract_strided_slice %0 {offsets = [0, 9], sizes = [8, 1], strides = [1, 1]} : vector<8x16xi32> to vector<8x1xi32>
    %52 = vector.broadcast %51 : vector<8x1xi32> to vector<8x128xi32>
    %53 = arith.cmpi eq, %52, %4 : vector<8x128xi32>
    %54 = arith.extui %53 : vector<8x128xi1> to vector<8x128xi32>
    %55 = arith.addi %50, %54 : vector<8x128xi32>
    %56 = vector.extract_strided_slice %0 {offsets = [0, 10], sizes = [8, 1], strides = [1, 1]} : vector<8x16xi32> to vector<8x1xi32>
    %57 = vector.broadcast %56 : vector<8x1xi32> to vector<8x128xi32>
    %58 = arith.cmpi eq, %57, %4 : vector<8x128xi32>
    %59 = arith.extui %58 : vector<8x128xi1> to vector<8x128xi32>
    %60 = arith.addi %55, %59 : vector<8x128xi32>
    %61 = vector.extract_strided_slice %0 {offsets = [0, 11], sizes = [8, 1], strides = [1, 1]} : vector<8x16xi32> to vector<8x1xi32>
    %62 = vector.broadcast %61 : vector<8x1xi32> to vector<8x128xi32>
    %63 = arith.cmpi eq, %62, %4 : vector<8x128xi32>
    %64 = arith.extui %63 : vector<8x128xi1> to vector<8x128xi32>
    %65 = arith.addi %60, %64 : vector<8x128xi32>
    %66 = vector.extract_strided_slice %0 {offsets = [0, 12], sizes = [8, 1], strides = [1, 1]} : vector<8x16xi32> to vector<8x1xi32>
    %67 = vector.broadcast %66 : vector<8x1xi32> to vector<8x128xi32>
    %68 = arith.cmpi eq, %67, %4 : vector<8x128xi32>
    %69 = arith.extui %68 : vector<8x128xi1> to vector<8x128xi32>
    %70 = arith.addi %65, %69 : vector<8x128xi32>
    %71 = vector.extract_strided_slice %0 {offsets = [0, 13], sizes = [8, 1], strides = [1, 1]} : vector<8x16xi32> to vector<8x1xi32>
    %72 = vector.broadcast %71 : vector<8x1xi32> to vector<8x128xi32>
    %73 = arith.cmpi eq, %72, %4 : vector<8x128xi32>
    %74 = arith.extui %73 : vector<8x128xi1> to vector<8x128xi32>
    %75 = arith.addi %70, %74 : vector<8x128xi32>
    %76 = vector.extract_strided_slice %0 {offsets = [0, 14], sizes = [8, 1], strides = [1, 1]} : vector<8x16xi32> to vector<8x1xi32>
    %77 = vector.broadcast %76 : vector<8x1xi32> to vector<8x128xi32>
    %78 = arith.cmpi eq, %77, %4 : vector<8x128xi32>
    %79 = arith.extui %78 : vector<8x128xi1> to vector<8x128xi32>
    %80 = arith.addi %75, %79 : vector<8x128xi32>
    %81 = vector.extract_strided_slice %0 {offsets = [0, 15], sizes = [8, 1], strides = [1, 1]} : vector<8x16xi32> to vector<8x1xi32>
    %82 = vector.broadcast %81 : vector<8x1xi32> to vector<8x128xi32>
    %83 = arith.cmpi eq, %82, %4 : vector<8x128xi32>
    %84 = arith.extui %83 : vector<8x128xi1> to vector<8x128xi32>
    %85 = arith.addi %80, %84 : vector<8x128xi32>
    %86 = arith.sitofp %85 : vector<8x128xi32> to vector<8x128xf32>
    %c0_1 = arith.constant 0 : index
    %c0_2 = arith.constant 0 : index
    %87 = vector.load %arg3[%c0_1, %c0_2] : memref<128x128xf32, #tpu.memory_space<vmem>>, vector<128x128xf32>
    %cst = arith.constant dense<0.000000e+00> : vector<8x128xf32>
    %88 = tpu.matmul %86, %87, %cst {dimension_numbers = #tpu.dot_dimension_numbers<[1], [0], [0], [1], [0, 0, 1, 1], [], []>} : vector<8x128xf32>, vector<128x128xf32>, vector<8x128xf32> -> vector<8x128xf32>
    %c0_i32_3 = arith.constant 0 : i32
    %89 = arith.cmpi eq, %arg1, %c0_i32_3 : i32
    %90 = arith.extui %89 : i1 to i32
    %c0_i32_4 = arith.constant 0 : i32
    %91 = arith.cmpi ne, %90, %c0_i32_4 : i32
    scf.if %91 {
      %cst_11 = arith.constant 0.000000e+00 : f32
      %98 = vector.broadcast %cst_11 : f32 to vector<8x128xf32>
      %c0_12 = arith.constant 0 : index
      %c0_13 = arith.constant 0 : index
      %99 = vector.load %arg6[%c0_12, %c0_13] : memref<8x128xf32, #tpu.memory_space<vmem>>, vector<8x128xf32>
      tpu.vector_store %arg6[%c0_12, %c0_13], %98 {strides = array<i32>} : memref<8x128xf32, #tpu.memory_space<vmem>>, vector<8x128xf32>,
    } else {
    }
    %c0_5 = arith.constant 0 : index
    %c0_6 = arith.constant 0 : index
    %92 = vector.load %arg6[%c0_5, %c0_6] : memref<8x128xf32, #tpu.memory_space<vmem>>, vector<8x128xf32>
    %93 = arith.addf %92, %88 : vector<8x128xf32>
    %c0_7 = arith.constant 0 : index
    %c0_8 = arith.constant 0 : index
    %94 = vector.load %arg6[%c0_7, %c0_8] : memref<8x128xf32, #tpu.memory_space<vmem>>, vector<8x128xf32>
    tpu.vector_store %arg6[%c0_7, %c0_8], %93 {strides = array<i32>} : memref<8x128xf32, #tpu.memory_space<vmem>>, vector<8x128xf32>,
    %c0_i32_9 = arith.constant 0 : i32
    %95 = arith.cmpi eq, %arg1, %c0_i32_9 : i32
    %96 = arith.extui %95 : i1 to i32
    %c0_i32_10 = arith.constant 0 : i32
    %97 = arith.cmpi ne, %96, %c0_i32_10 : i32
    scf.if %97 {
      %c0_11 = arith.constant 0 : index
      %c0_12 = arith.constant 0 : index
      %98 = vector.load %arg6[%c0_11, %c0_12] : memref<8x128xf32, #tpu.memory_space<vmem>>, vector<8x128xf32>
      %c0_13 = arith.constant 0 : index
      %c0_14 = arith.constant 0 : index
      %99 = vector.load %arg4[%c0_13, %c0_14] : memref<1x128xf32, #tpu.memory_space<vmem>>, vector<1x128xf32>
      %100 = vector.broadcast %99 : vector<1x128xf32> to vector<8x128xf32>
      %101 = arith.addf %98, %100 : vector<8x128xf32>
      %c0_15 = arith.constant 0 : index
      %c0_16 = arith.constant 0 : index
      %102 = vector.load %arg5[%c0_15, %c0_16] : memref<8x128xf32, #tpu.memory_space<vmem>>, vector<8x128xf32>
      tpu.vector_store %arg5[%c0_15, %c0_16], %101 {strides = array<i32>} : memref<8x128xf32, #tpu.memory_space<vmem>>, vector<8x128xf32>,
    } else {
    }
    return
  }
  func.func @transform_0(%arg0: i32, %arg1: i32) -> (i32, i32) {
    %c0_i32 = arith.constant 0 : i32
    %c0_i32_0 = arith.constant 0 : i32
    return %arg0, %c0_i32 : i32, i32
  }
  func.func @transform_1(%arg0: i32, %arg1: i32) -> (i32, i32) {
    %c0_i32 = arith.constant 0 : i32
    %c0_i32_0 = arith.constant 0 : i32
    return %arg1, %c0_i32 : i32, i32
  }
  func.func @transform_2(%arg0: i32, %arg1: i32) -> (i32, i32) {
    %c0_i32 = arith.constant 0 : i32
    %c0_i32_0 = arith.constant 0 : i32
    %c0_i32_1 = arith.constant 0 : i32
    return %c0_i32, %c0_i32_0 : i32, i32
  }
  func.func @transform_3(%arg0: i32, %arg1: i32) -> (i32, i32) {
    %c0_i32 = arith.constant 0 : i32
    %c0_i32_0 = arith.constant 0 : i32
    return %arg0, %c0_i32 : i32, i32
  }
}

</mosaic_0001>

<llo_original>
// kernel: forward.1
$region0: #{forward.1}
  #allocation0 [shape = 'u32[]', space=smem, size = 0x4, offset = 0x4, fixed_abs, tag = 'smem constant byte address 0x4 - core index']
  #allocation1 [shape = 'u32[72,128]{1,0:T(1,128)}', space=vmem, size = 0x9000, scoped, tag = 'internal scratch']
  #allocation2 [shape = 'f32[8,128]{1,0:T(8,128)}', space=vmem, size = 0x1000, scoped, tag = 'scratch operand']
  %s0 = inlined_call_operand.hbm [shape: s32[8,16], index: 0, kind: input, shape index: {}]
  %s1 = inlined_call_operand.hbm [shape: f32[128,128], index: 1, kind: input, shape index: {}]
  %s2 = inlined_call_operand.vmem [shape: f32[1,128], index: 2, kind: input, shape index: {}]
  %s3 = inlined_call_operand.vmem [shape: f32[8,128], index: 3, kind: output, shape index: {}]
  %s4 = sld [smem:[#allocation0]]
  $region38: #{forward.1} parent=0
    _
  %s6 = ssub.s32 1, %s4
  %s7 = scalar_select 0, %s6, %s4
  $region1: #{forward.1} parent=0
    #allocation3 [shape = 'u8[4096]{0}', space=vmem, size = 0x1000, scoped, tag = 'input window, operand 0, single buffered']
    #allocation4 [shape = 's32[1]{0}', space=sflag, size = 0x4, scoped, tag = 'scoped memory for forward.1']
    #allocation5 [shape = 'u8[65536]{0}', space=vmem, size = 0x10000, scoped, tag = 'input window, operand 1, single buffered']
    #allocation6 [shape = 's32[1]{0}', space=sflag, size = 0x4, scoped, tag = 'scoped memory for forward.1']
    %8 = vsyncpa [#allocation4], 0
    %9 = vsyncpa [#allocation6], 0
    // Predicated region
    $region2: #{forward.1} parent=1 // pred_check
      _
    $region3: #{forward.1} parent=1 // pred_check_branch
      %11 = sbr.rel (0) target = $region5
    $region4: #{forward.1} parent=1 // pred_region
      %13 = vsyncadd [#allocation4], 0
      %s15 = sshll.u32 %s0, 4
      %s16 = int_to_ptr.hbm [resolvable:$true] %s15
      %s17 = sshll.u32 [#allocation3], 4
      %s18 = int_to_ptr.vmem [resolvable:$true] %s17
      %20 = dma.hbm_to_vmem [thread:$0]  %s16, 128, %s18, [#allocation4]
    $region5: #{forward.1} parent=1 // pred_fallthru
      _
    // Predicated region
    $region6: #{forward.1} parent=1 // pred_check
      _
    $region7: #{forward.1} parent=1 // pred_check_branch
      %22 = sbr.rel (0) target = $region9
    $region8: #{forward.1} parent=1 // pred_region
      %24 = vsyncadd [#allocation6], 0
      %s25 = sshll.u32 %s1, 4
      %s26 = int_to_ptr.hbm [resolvable:$true] %s25
      %s27 = sshll.u32 [#allocation5], 4
      %s28 = int_to_ptr.vmem [resolvable:$true] %s27
      %33 = dma.hbm_to_vmem [thread:$0]  %s26, 2048, %s28, [#allocation6], 128, 128, 8
    $region9: #{forward.1} parent=1 // pred_fallthru
      _
    // Predicated region
    $region10: #{forward.1} parent=1 // pred_check
      _
    $region11: #{forward.1} parent=1 // pred_check_branch
      %35 = sbr.rel (0) target = $region13
    $region12: #{forward.1} parent=1 // pred_region
      _
    $region13: #{forward.1} parent=1 // pred_fallthru
      _
    // Predicated region
    $region14: #{forward.1} parent=1 // pred_check
      _
    $region15: #{forward.1} parent=1 // pred_check_branch
      %37 = sbr.rel (0) target = $region17
    $region16: #{forward.1} parent=1 // pred_region
      %39 = dma.done [#allocation4], 128
    $region17: #{forward.1} parent=1 // pred_fallthru
      _
    // Predicated region
    $region18: #{forward.1} parent=1 // pred_check
      _
    $region19: #{forward.1} parent=1 // pred_check_branch
      %41 = sbr.rel (0) target = $region21
    $region20: #{forward.1} parent=1 // pred_region
      %43 = dma.done [#allocation6], 2048
    $region21: #{forward.1} parent=1 // pred_fallthru
      _
    %v44 = vld [vmem:[#allocation3] sm:$0xff]
    %s45 = smul.u32 0, 128
    %v46 = vlaneseq
    %v47 = vand.u32 %v46, 127
    %v48 = vstv %s45
    %v49 = vadd.s32 %v48, %v47
    %50 = vset.pattern.permute.xlu0 0
    %51 = vperm.xlu0 %50, %v44
    %v52 = vpop.permute.xlu0 %51
    %vm53 = vcmp.eq.s32.totalorder %v52, %v49
    %v54 = vsel %vm53, 1, 0
    %55 = vset.pattern.permute.xlu0 1
    %56 = vperm.xlu0 %55, %v44
    %v57 = vpop.permute.xlu0 %56
    %vm58 = vcmp.eq.s32.totalorder %v57, %v49
    %v59 = vsel %vm58, 1, 0
    %v60 = vadd.s32 %v54, %v59
    %61 = vset.pattern.permute.xlu0 2
    %62 = vperm.xlu0 %61, %v44
    %v63 = vpop.permute.xlu0 %62
    %vm64 = vcmp.eq.s32.totalorder %v63, %v49
    %v65 = vsel %vm64, 1, 0
    %v66 = vadd.s32 %v60, %v65
    %67 = vset.pattern.permute.xlu0 3
    %68 = vperm.xlu0 %67, %v44
    %v69 = vpop.permute.xlu0 %68
    %vm70 = vcmp.eq.s32.totalorder %v69, %v49
    %v71 = vsel %vm70, 1, 0
    %v72 = vadd.s32 %v66, %v71
    %73 = vset.pattern.permute.xlu0 4
    %74 = vperm.xlu0 %73, %v44
    %v75 = vpop.permute.xlu0 %74
    %vm76 = vcmp.eq.s32.totalorder %v75, %v49
    %v77 = vsel %vm76, 1, 0
    %v78 = vadd.s32 %v72, %v77
    %79 = vset.pattern.permute.xlu0 5
    %80 = vperm.xlu0 %79, %v44
    %v81 = vpop.permute.xlu0 %80
    %vm82 = vcmp.eq.s32.totalorder %v81, %v49
    %v83 = vsel %vm82, 1, 0
    %v84 = vadd.s32 %v78, %v83
    %85 = vset.pattern.permute.xlu0 6
    %86 = vperm.xlu0 %85, %v44
    %v87 = vpop.permute.xlu0 %86
    %vm88 = vcmp.eq.s32.totalorder %v87, %v49
    %v89 = vsel %vm88, 1, 0
    %v90 = vadd.s32 %v84, %v89
    %91 = vset.pattern.permute.xlu0 7
    %92 = vperm.xlu0 %91, %v44
    %v93 = vpop.permute.xlu0 %92
    %vm94 = vcmp.eq.s32.totalorder %v93, %v49
    %v95 = vsel %vm94, 1, 0
    %v96 = vadd.s32 %v90, %v95
    %97 = vset.pattern.permute.xlu0 8
    %98 = vperm.xlu0 %97, %v44
    %v99 = vpop.permute.xlu0 %98
    %vm100 = vcmp.eq.s32.totalorder %v99, %v49
    %v101 = vsel %vm100, 1, 0
    %v102 = vadd.s32 %v96, %v101
    %103 = vset.pattern.permute.xlu0 9
    %104 = vperm.xlu0 %103, %v44
    %v105 = vpop.permute.xlu0 %104
    %vm106 = vcmp.eq.s32.totalorder %v105, %v49
    %v107 = vsel %vm106, 1, 0
    %v108 = vadd.s32 %v102, %v107
    %109 = vset.pattern.permute.xlu0 10
    %110 = vperm.xlu0 %109, %v44
    %v111 = vpop.permute.xlu0 %110
    %vm112 = vcmp.eq.s32.totalorder %v111, %v49
    %v113 = vsel %vm112, 1, 0
    %v114 = vadd.s32 %v108, %v113
    %115 = vset.pattern.permute.xlu0 11
    %116 = vperm.xlu0 %115, %v44
    %v117 = vpop.permute.xlu0 %116
    %vm118 = vcmp.eq.s32.totalorder %v117, %v49
    %v119 = vsel %vm118, 1, 0
    %v120 = vadd.s32 %v114, %v119
    %121 = vset.pattern.permute.xlu0 12
    %122 = vperm.xlu0 %121, %v44
    %v123 = vpop.permute.xlu0 %122
    %vm124 = vcmp.eq.s32.totalorder %v123, %v49
    %v125 = vsel %vm124, 1, 0
    %v126 = vadd.s32 %v120, %v125
    %127 = vset.pattern.permute.xlu0 13
    %128 = vperm.xlu0 %127, %v44
    %v129 = vpop.permute.xlu0 %128
    %vm130 = vcmp.eq.s32.totalorder %v129, %v49
    %v131 = vsel %vm130, 1, 0
    %v132 = vadd.s32 %v126, %v131
    %133 = vset.pattern.permute.xlu0 14
    %134 = vperm.xlu0 %133, %v44
    %v135 = vpop.permute.xlu0 %134
    %vm136 = vcmp.eq.s32.totalorder %v135, %v49
    %v137 = vsel %vm136, 1, 0
    %v138 = vadd.s32 %v132, %v137
    %139 = vset.pattern.permute.xlu0 15
    %140 = vperm.xlu0 %139, %v44
    %v141 = vpop.permute.xlu0 %140
    %vm142 = vcmp.eq.s32.totalorder %v141, %v49
    %v143 = vsel %vm142, 1, 0
    %v144 = vadd.s32 %v138, %v143
    %v145 = vcvt.s32.f32 %v144
    %v146 = vld [vmem:[#allocation5] sm:$0xff]
    %v147 = vld [vmem:[#allocation5 + $0x8] sm:$0xff]
    %v148 = vld [vmem:[#allocation5 + $0x10] sm:$0xff]
    %v149 = vld [vmem:[#allocation5 + $0x18] sm:$0xff]
    %v150 = vld [vmem:[#allocation5 + $0x20] sm:$0xff]
    %v151 = vld [vmem:[#allocation5 + $0x28] sm:$0xff]
    %v152 = vld [vmem:[#allocation5 + $0x30] sm:$0xff]
    %v153 = vld [vmem:[#allocation5 + $0x38] sm:$0xff]
    %v154 = vld [vmem:[#allocation5 + $0x40] sm:$0xff]
    %v155 = vld [vmem:[#allocation5 + $0x48] sm:$0xff]
    %v156 = vld [vmem:[#allocation5 + $0x50] sm:$0xff]
    %v157 = vld [vmem:[#allocation5 + $0x58] sm:$0xff]
    %v158 = vld [vmem:[#allocation5 + $0x60] sm:$0xff]
    %v159 = vld [vmem:[#allocation5 + $0x68] sm:$0xff]
    %v160 = vld [vmem:[#allocation5 + $0x70] sm:$0xff]
    %v161 = vld [vmem:[#allocation5 + $0x78] sm:$0xff]
    %162 = vmatpush.msra.mxu0 %v161
    %163 = vmatpush.msra.mxu0 %v160
    %164 = vmatpush.msra.mxu0 %v159
    %165 = vmatpush.msra.mxu0 %v158
    %166 = vmatpush.msra.mxu0 %v157
    %167 = vmatpush.msra.mxu0 %v156
    %168 = vmatpush.msra.mxu0 %v155
    %169 = vmatpush.msra.mxu0 %v154
    %170 = vmatpush.msra.mxu0 %v153
    %171 = vmatpush.msra.mxu0 %v152
    %172 = vmatpush.msra.mxu0 %v151
    %173 = vmatpush.msra.mxu0 %v150
    %174 = vmatpush.msra.mxu0 %v149
    %175 = vmatpush.msra.mxu0 %v148
    %176 = vmatpush.msra.mxu0 %v147
    %177 = vmatpush.msra.mxu0 %v146
    %178 = vmatmul.f32.gmra.mxu0 %v145
    %v179 = vpop.f32.mrf.mxu0
    %v180 = vadd.f32 0.0, %v179
    %181 = vdwg.mxu0
    %p182 = scmp.eq.s32.totalorder 0, 0
    // Predicated region
    $region22: #{forward.1} parent=1 // pred_check
      %p183 = pneg %p182
    $region23: #{forward.1} parent=1 // pred_check_branch
      %185 = sbr.rel (%p183) target = $region25
    $region24: #{forward.1} parent=1 // pred_region
      %186 = vst [vmem:[#allocation2] sm:$0xff] 0.0
    $region25: #{forward.1} parent=1 // pred_fallthru
      _
    %v187 = vld [vmem:[#allocation2] sm:$0xff]
    %v188 = vadd.f32 %v187, %v180
    %189 = vst [vmem:[#allocation2] sm:$0xff] %v188
    // Predicated region
    $region26: #{forward.1} parent=1 // pred_check
      %p190 = pneg %p182
    $region27: #{forward.1} parent=1 // pred_check_branch
      %192 = sbr.rel (%p190) target = $region29
    $region28: #{forward.1} parent=1 // pred_region
      %v193 = vld [vmem:[#allocation2] sm:$0xff]
      %v194 = vld [vmem:[%s2] sm:$0x1]
      %v196 = vperm.slane %v194, 0
      %v198 = vadd.f32 %v193, %v196
      %199 = vst [vmem:[%s3] sm:$0xff] %v198
    $region29: #{forward.1} parent=1 // pred_fallthru
      _
    // Predicated region
    $region30: #{forward.1} parent=1 // pred_check
      _
    $region31: #{forward.1} parent=1 // pred_check_branch
      %201 = sbr.rel (0) target = $region33
    $region32: #{forward.1} parent=1 // pred_region
      _
    $region33: #{forward.1} parent=1 // pred_fallthru
      _
    // Predicated region
    $region34: #{forward.1} parent=1 // pred_check
      _
    $region35: #{forward.1} parent=1 // pred_check_branch
      %203 = sbr.rel (0) target = $region37
    $region36: #{forward.1} parent=1 // pred_region
      _
    $region37: #{forward.1} parent=1 // pred_fallthru
      _
    %204 = vsyncpa [#allocation4], 1
    %205 = vsyncpa [#allocation6], 1

</llo_original>
